<compile_context>
chip_gen: v7x
topology: tpu7x:2x2x1
jax: 0.10.0
libtpu: 0.0.40
codegen_flags: <defaults>
</compile_context>

<pallas_src>
import math

import jax
import jax.numpy as jnp
import numpy as np
from jax import lax
from jax.experimental import pallas as pl
from jax.experimental.pallas import tpu as pltpu

REC_FACTOR = 100.0
OVERFLOW_FACTOR = 100.0

_LANES = 128
_IMG_TILE_ROWS = 2048        # (2048,128) f32 block = 1 MiB per input
_HID_TILE_ROWS = 2048
_HID_TILE_ROWS_MAX = 4096    # allow up to 2 MiB so a channel-period multiple fits
_VMEM_LIMIT = 32 * 1024 * 1024   # safe on v5e/v6e (128 MiB phys) and v7x (64 MiB)


def _round_up(x, m):
    return ((x + m - 1) // m) * m


def _to_rows(x):
    """Flatten to a lane-dense (rows, 128) slab.

    Free (bitcast reshape) whenever x.size is a multiple of 128; otherwise a
    small zero-pad copy (zeros contribute exactly 0 to every partial sum)."""
    flat = x.reshape(-1)
    n = flat.shape[0]
    rows = pl.cdiv(n, _LANES)
    if rows * _LANES != n:
        flat = jnp.pad(flat, (0, rows * _LANES - n))
    return flat.reshape(rows, _LANES), n, rows


def _make_kernel(tile_img, tile_hid, t_img, t_hid, rows_img, rows_hid,
                 grid_len, use_chan_mask):
    img_partial = (rows_img % tile_img) != 0
    hid_partial = (rows_hid % tile_hid) != 0

    def fold(x, tr):
        # (tr,128) -> (8,128): layout-preserving reshape + pure VALU adds.
        return jnp.sum(x.reshape(tr // 8, 8, _LANES), axis=0)

    def body(img_ref, tgt_ref, hid_ref, msk_ref, out_ref, acc_ref):
        g = pl.program_id(0)

        @pl.when(g == 0)
        def _init():
            acc_ref[...] = jnp.zeros_like(acc_ref)

        def img_work(mask_rows):
            img = img_ref[...].astype(jnp.float32)
            valid = None
            if mask_rows:  # only the true partial edge tile pays for this
                row = g * tile_img + lax.broadcasted_iota(
                    jnp.int32, (tile_img, _LANES), 0)
                valid = row < rows_img
            rec = jnp.abs(img - tgt_ref[...].astype(jnp.float32))
            if mask_rows:
                rec = jnp.where(valid, rec, 0.0)
            acc_ref[0] += fold(rec, tile_img)
            # |x - clip(x,-b,b)| == max(|x| - b, 0)
            ovf = jnp.maximum(jnp.abs(img) - 10.0, 0.0)
            if mask_rows:
                ovf = jnp.where(valid, ovf, 0.0)
            acc_ref[1] += fold(ovf, tile_img)

        def hid_work(mask_rows):
            hid = hid_ref[...].astype(jnp.float32)
            ovf = jnp.maximum(jnp.abs(hid) - 5.0, 0.0)
            if use_chan_mask:
                # Resident (tile_hid,1) column: 1.0 on hidden-channel rows,
                # 0.0 on RGB rows.  Same block every step -> DMA'd once.
                ovf = jnp.where(msk_ref[...] > 0.5, ovf, 0.0)
            if mask_rows:
                row = g * tile_hid + lax.broadcasted_iota(
                    jnp.int32, (tile_hid, _LANES), 0)
                ovf = jnp.where(row < rows_hid, ovf, 0.0)
            acc_ref[2] += fold(ovf, tile_hid)

        def gate(t, partial, work):
            # Skip clamped revisit tiles entirely; mask only the true edge tile.
            if partial:
                if t > 1:
                    pl.when(g < t - 1)(lambda: work(False))
                pl.when(g == t - 1)(lambda: work(True))
            elif t < grid_len:
                pl.when(g < t)(lambda: work(False))
            else:
                work(False)

        gate(t_img, img_partial, img_work)
        gate(t_hid, hid_partial, hid_work)

        @pl.when(g == grid_len - 1)
        def _finalize():
            out_ref[...] = acc_ref[...]

    if use_chan_mask:
        def kernel(img_ref, tgt_ref, hid_ref, msk_ref, out_ref, acc_ref):
            body(img_ref, tgt_ref, hid_ref, msk_ref, out_ref, acc_ref)
    else:
        def kernel(img_ref, tgt_ref, hid_ref, out_ref, acc_ref):
            body(img_ref, tgt_ref, hid_ref, None, out_ref, acc_ref)
    return kernel


def _run(output_img, target, hid2d, rows_hid, n_hid, tile_hid, mask_col,
         img_tile_rows):
    img2d, n_out, rows_img = _to_rows(output_img)
    tgt2d, n_tgt, _ = _to_rows(target)
    if n_tgt != n_out:
        raise ValueError("output_img and target must have the same size")

    tile_img = min(_round_up(img_tile_rows, 8), _round_up(rows_img, 8))
    t_img = pl.cdiv(rows_img, tile_img)
    t_hid = pl.cdiv(rows_hid, tile_hid)
    grid_len = max(t_img, t_hid)

    use_mask = mask_col is not None
    kernel = _make_kernel(tile_img, tile_hid, t_img, t_hid, rows_img, rows_hid,
                          grid_len, use_mask)

    # Clamp the block index past a stream's extent: the block is revisited
    # (no re-DMA) and pl.when skips its compute.
    img_spec = pl.BlockSpec((tile_img, _LANES),
                            lambda g: (jnp.minimum(g, t_img - 1), 0))
    hid_spec = pl.BlockSpec((tile_hid, _LANES),
                            lambda g: (jnp.minimum(g, t_hid - 1), 0))
    in_specs = [img_spec, img_spec, hid_spec]
    operands = [img2d, tgt2d, hid2d]
    if use_mask:
        in_specs.append(pl.BlockSpec((tile_hid, 1), lambda g: (0, 0)))
        operands.append(mask_col)

    bytes_accessed = int(sum(int(o.size) * o.dtype.itemsize for o in operands)
                         + 3 * 8 * _LANES * 4)
    flops = int(8 * img2d.size + 5 * hid2d.size)

    partials = pl.pallas_call(
        kernel,
        out_shape=jax.ShapeDtypeStruct((3, 8, _LANES), jnp.float32),
        grid=(grid_len,),
        in_specs=in_specs,
        out_specs=pl.BlockSpec((3, 8, _LANES), lambda g: (0, 0, 0)),
        scratch_shapes=[pltpu.VMEM((3, 8, _LANES), jnp.float32)],
        compiler_params=pltpu.CompilerParams(
            dimension_semantics=("arbitrary",),
            vmem_limit_bytes=_VMEM_LIMIT),
        cost_estimate=pl.CostEstimate(
            flops=flops, transcendentals=0, bytes_accessed=bytes_accessed),
    )(*operands)

    sums = jnp.sum(partials, axis=(1, 2))   # [rec_sum, rgb_ovf_sum, hid_ovf_sum]
    rec_loss = REC_FACTOR * sums[0] / n_out
    overflow_loss = OVERFLOW_FACTOR * (sums[2] / n_hid + sums[1] / n_out)
    return {"rec_loss": rec_loss, "overflow_loss": overflow_loss}


def ca_loss(output_img, target, hidden, *,
            img_tile_rows=_IMG_TILE_ROWS, hid_tile_rows=_HID_TILE_ROWS):
    """CALoss forward with an already-extracted hidden tensor."""
    hid2d, n_hid, rows_hid = _to_rows(hidden)
    tile_hid = min(_round_up(hid_tile_rows, 8), _round_up(rows_hid, 8))
    return _run(output_img, target, hid2d, rows_hid, n_hid, tile_hid,
                mask_col=None, img_tile_rows=img_tile_rows)


def ca_loss_from_cells(output_img, target, cells, *, n_rgb=3,
                       img_tile_rows=_IMG_TILE_ROWS,
                       hid_tile_rows=_HID_TILE_ROWS):
    """CALoss forward fed with the raw cell state (no hidden-slice HBM copy).

    When H*W is a multiple of 128 (channel boundaries fall on 128-lane row
    boundaries) the kernel streams `cells` directly and masks RGB-channel rows
    with a tiny resident (tile, 1) column; otherwise it falls back to slicing
    the hidden channels (one extra HBM copy)."""
    if cells.ndim != 4:
        raise ValueError("cells must be (B, C, H, W)")
    b, c, h, w = cells.shape
    if n_rgb >= c:
        raise ValueError("n_rgb must be smaller than the channel count")
    hw = h * w
    if hw % _LANES == 0:
        chunks = hw // _LANES                 # 128-lane rows per channel plane
        period = c * chunks                   # rows per batch element
        step = period * 8 // math.gcd(period, 8)   # lcm(period, 8)
        if step <= _HID_TILE_ROWS_MAX:
            cells2d = cells.reshape(-1, _LANES)     # free reshape, no copy
            rows_hid = cells2d.shape[0]             # == b * period
            tile_hid = _round_up(min(hid_tile_rows, _HID_TILE_ROWS_MAX), step)
            tile_hid = min(tile_hid, _round_up(rows_hid, step))
            # Periodic hidden-channel row mask for one tile (identical for
            # every tile because tile_hid % period == 0).
            r = np.arange(tile_hid)
            chan = (r // chunks) % c
            mask_col = jnp.asarray(
                (chan >= n_rgb).astype(np.float32).reshape(tile_hid, 1))
            n_hid = b * (c - n_rgb) * hw
            return _run(output_img, target, cells2d, rows_hid, n_hid, tile_hid,
                        mask_col=mask_col, img_tile_rows=img_tile_rows)
    # Ragged spatial plane or oversized channel period: slice fallback.
    return ca_loss(output_img, target, cells[:, n_rgb:, :, :],
                   img_tile_rows=img_tile_rows, hid_tile_rows=hid_tile_rows)


def get_hidden(cells):
    """Stand-in for model.get_hidden: hidden = channels beyond RGB (NCHW)."""
    # TODO(synk): model.get_hidden is undefined in the reference module; NCA
    # convention (first 3 channels = RGB, rest = hidden) is assumed.
    return cells[:, 3:, :, :]


def _reference(output_img, target, hidden):
    """Pure-JAX reference matching the PyTorch module exactly (f32 math)."""
    output_img = output_img.astype(jnp.float32)
    target = target.astype(jnp.float32)
    hidden = hidden.astype(jnp.float32)
    rec = REC_FACTOR * jnp.mean(jnp.abs(output_img - target))
    h_ovf = jnp.mean(jnp.abs(hidden - jnp.clip(hidden, -5.0, 5.0)))
    r_ovf = jnp.mean(jnp.abs(output_img - jnp.clip(output_img, -10.0, 10.0)))
    return {"rec_loss": rec, "overflow_loss": OVERFLOW_FACTOR * (h_ovf + r_ovf)}


def _check(name, got, ref, tol=1e-5):
    for key in ("rec_loss", "overflow_loss"):
        ok = jnp.allclose(got[key], ref[key], rtol=tol, atol=tol)
        assert bool(ok), f"{name}: {key} got={got[key]} ref={ref[key]}"


if __name__ == "__main__":
    key = jax.random.PRNGKey(0)

    def make_inputs(k, b, c, h, w, dtype=jnp.float32):
        k1, k2, k3 = jax.random.split(k, 3)
        # scaled so both overflow clips (+/-5 hidden, +/-10 rgb) trigger
        cells = (8.0 * jax.random.normal(k1, (b, c, h, w))).astype(dtype)
        output_img = (12.0 * jax.random.normal(k2, (b, 3, h, w))).astype(dtype)
        target = jax.random.normal(k3, (b, 3, h, w)).astype(dtype)
        return output_img, target, cells

    k0, k1, k2, k3 = jax.random.split(key, 4)

    # 1) cells-direct path (no hidden slice copy), single tile per stream
    oi, tg, ce = make_inputs(k0, 2, 16, 16, 16)
    got = ca_loss_from_cells(oi, tg, ce)
    jax.block_until_ready(got)
    _check("cells_16x16", got, _reference(oi, tg, get_hidden(ce)))

    # 2) cells-direct, multi-tile: forced small tiles exercise clamping,
    #    per-stream pl.when gating and the periodic channel mask across tiles
    oi, tg, ce = make_inputs(k1, 4, 16, 64, 64)
    got = ca_loss_from_cells(oi, tg, ce, img_tile_rows=128, hid_tile_rows=512)
    jax.block_until_ready(got)
    _check("cells_multi_tile", got, _reference(oi, tg, get_hidden(ce)))

    # 3) pre-sliced hidden API, multi-tile with a partial edge block
    oi, tg, ce = make_inputs(k2, 2, 16, 64, 64)
    hid = get_hidden(ce)
    got = ca_loss(oi, tg, hid, img_tile_rows=64, hid_tile_rows=72)
    jax.block_until_ready(got)
    _check("hidden_multi_tile_edge", got, _reference(oi, tg, hid))

    # 4) ragged spatial size -> automatic fallback to the slice path
    oi, tg, ce = make_inputs(k3, 1, 7, 10, 10)
    got = ca_loss_from_cells(oi, tg, ce)
    jax.block_until_ready(got)
    _check("ragged_10x10", got, _reference(oi, tg, get_hidden(ce)))

    # 5) bf16 activations: half the HBM bytes, per-tile f32 upcast in-kernel
    oi, tg, ce = make_inputs(k0, 2, 16, 32, 32, dtype=jnp.bfloat16)
    got = ca_loss_from_cells(oi, tg, ce)
    jax.block_until_ready(got)
    _check("bf16_cells", got, _reference(oi, tg, get_hidden(ce)), tol=1e-4)

    print("KERNEL_OK")
</pallas_src>

<mosaic_0001>
module attributes {stable_mosaic.version = 11 : i64} {
  func.func @kernel(%arg0: i32, %arg1: memref<16x128xf32, #tpu.memory_space<vmem>>, %arg2: memref<16x128xf32, #tpu.memory_space<vmem>>, %arg3: memref<64x128xf32, #tpu.memory_space<vmem>>, %arg4: memref<64x1xf32, #tpu.memory_space<vmem>>, %arg5: memref<3x8x128xf32, #tpu.memory_space<vmem>>, %arg6: memref<3x8x128xf32, #tpu.memory_space<vmem>>) attributes {dimension_semantics = [#tpu.dimension_semantics<arbitrary>], iteration_bounds = array<i64: 1>, scalar_prefetch = 0 : i64, scratch_operands = 1 : i64, tpu.core_type = #tpu.core_type<tc>, window_params = [{transform_indices = @transform_0, window_bounds = array<i64: 16, 128>}, {transform_indices = @transform_1, window_bounds = array<i64: 16, 128>}, {transform_indices = @transform_2, window_bounds = array<i64: 64, 128>}, {pipeline_mode = #tpu.pipeline_mode<synchronous>, transform_indices = @transform_3, window_bounds = array<i64: 64, 1>}, {pipeline_mode = #tpu.pipeline_mode<synchronous>, transform_indices = @transform_4, window_bounds = array<i64: 3, 8, 128>}]} {
    %c0_i32 = arith.constant 0 : i32
    %0 = arith.cmpi eq, %arg0, %c0_i32 : i32
    %1 = arith.extui %0 : i1 to i32
    %c0_i32_0 = arith.constant 0 : i32
    %2 = arith.cmpi ne, %1, %c0_i32_0 : i32
    scf.if %2 {
      %cst_17 = arith.constant 0.000000e+00 : f32
      %30 = vector.broadcast %cst_17 : f32 to vector<3x8x128xf32>
      %c0_18 = arith.constant 0 : index
      %c0_19 = arith.constant 0 : index
      %c0_20 = arith.constant 0 : index
      %31 = vector.load %arg6[%c0_18, %c0_19, %c0_20] : memref<3x8x128xf32, #tpu.memory_space<vmem>>, vector<3x8x128xf32>
      tpu.vector_store %arg6[%c0_18, %c0_19, %c0_20], %30 {strides = array<i32>} : memref<3x8x128xf32, #tpu.memory_space<vmem>>, vector<3x8x128xf32>,
    } else {
    }
    %c0_i32_1 = arith.constant 0 : i32
    %3 = arith.cmpi eq, %arg0, %c0_i32_1 : i32
    %4 = arith.extui %3 : i1 to i32
    %c0_i32_2 = arith.constant 0 : i32
    %5 = arith.cmpi ne, %4, %c0_i32_2 : i32
    scf.if %5 {
      %c0_17 = arith.constant 0 : index
      %c0_18 = arith.constant 0 : index
      %30 = vector.load %arg1[%c0_17, %c0_18] : memref<16x128xf32, #tpu.memory_space<vmem>>, vector<16x128xf32>
      %c16_i32 = arith.constant 16 : i32
      %31 = arith.muli %arg0, %c16_i32 : i32
      %32 = tpu.iota {dimensions = array<i32: 0>} : vector<16x128xi32>
      %33 = vector.broadcast %31 : i32 to vector<16x128xi32>
      %34 = arith.addi %33, %32 : vector<16x128xi32>
      %c12_i32 = arith.constant 12 : i32
      %35 = vector.broadcast %c12_i32 : i32 to vector<16x128xi32>
      %36 = arith.cmpi slt, %34, %35 : vector<16x128xi32>
      %c0_19 = arith.constant 0 : index
      %c0_20 = arith.constant 0 : index
      %37 = vector.load %arg2[%c0_19, %c0_20] : memref<16x128xf32, #tpu.memory_space<vmem>>, vector<16x128xf32>
      %38 = arith.subf %30, %37 : vector<16x128xf32>
      %39 = math.absf %38 : vector<16x128xf32>
      %cst_21 = arith.constant 0.000000e+00 : f32
      %40 = vector.broadcast %cst_21 : f32 to vector<16x128xf32>
      %41 = arith.select %36, %39, %40 : vector<16x128xi1>, vector<16x128xf32>
      %c0_22 = arith.constant 0 : index
      %c0_23 = arith.constant 0 : index
      %c0_24 = arith.constant 0 : index
      %42 = vector.load %arg6[%c0_22, %c0_23, %c0_24] : memref<3x8x128xf32, #tpu.memory_space<vmem>>, vector<1x8x128xf32>
      %43 = vector.shape_cast %42 : vector<1x8x128xf32> to vector<8x128xf32>
      %44 = vector.shape_cast %41 : vector<16x128xf32> to vector<2x8x128xf32>
      %cst_25 = arith.constant dense<0.000000e+00> : vector<8x128xf32>
      %45 = vector.multi_reduction <add>, %44, %cst_25 [0] : vector<2x8x128xf32> to vector<8x128xf32>
      %46 = arith.addf %43, %45 : vector<8x128xf32>
      %c0_26 = arith.constant 0 : index
      %c0_27 = arith.constant 0 : index
      %c0_28 = arith.constant 0 : index
      %47 = vector.load %arg6[%c0_26, %c0_27, %c0_28] : memref<3x8x128xf32, #tpu.memory_space<vmem>>, vector<1x8x128xf32>
      %48 = vector.shape_cast %47 : vector<1x8x128xf32> to vector<8x128xf32>
      %49 = vector.shape_cast %46 : vector<8x128xf32> to vector<1x8x128xf32>
      tpu.vector_store %arg6[%c0_26, %c0_27, %c0_28], %49 {strides = array<i32>} : memref<3x8x128xf32, #tpu.memory_space<vmem>>, vector<1x8x128xf32>,
      %50 = math.absf %30 : vector<16x128xf32>
      %cst_29 = arith.constant 1.000000e+01 : f32
      %51 = vector.broadcast %cst_29 : f32 to vector<16x128xf32>
      %52 = arith.subf %50, %51 : vector<16x128xf32>
      %cst_30 = arith.constant 0.000000e+00 : f32
      %53 = vector.broadcast %cst_30 : f32 to vector<16x128xf32>
      %54 = arith.maximumf %52, %53 : vector<16x128xf32>
      %cst_31 = arith.constant 0.000000e+00 : f32
      %55 = vector.broadcast %cst_31 : f32 to vector<16x128xf32>
      %56 = arith.select %36, %54, %55 : vector<16x128xi1>, vector<16x128xf32>
      %c1 = arith.constant 1 : index
      %c0_32 = arith.constant 0 : index
      %c0_33 = arith.constant 0 : index
      %57 = vector.load %arg6[%c1, %c0_32, %c0_33] : memref<3x8x128xf32, #tpu.memory_space<vmem>>, vector<1x8x128xf32>
      %58 = vector.shape_cast %57 : vector<1x8x128xf32> to vector<8x128xf32>
      %59 = vector.shape_cast %56 : vector<16x128xf32> to vector<2x8x128xf32>
      %cst_34 = arith.constant dense<0.000000e+00> : vector<8x128xf32>
      %60 = vector.multi_reduction <add>, %59, %cst_34 [0] : vector<2x8x128xf32> to vector<8x128xf32>
      %61 = arith.addf %58, %60 : vector<8x128xf32>
      %c1_35 = arith.constant 1 : index
      %c0_36 = arith.constant 0 : index
      %c0_37 = arith.constant 0 : index
      %62 = vector.load %arg6[%c1_35, %c0_36, %c0_37] : memref<3x8x128xf32, #tpu.memory_space<vmem>>, vector<1x8x128xf32>
      %63 = vector.shape_cast %62 : vector<1x8x128xf32> to vector<8x128xf32>
      %64 = vector.shape_cast %61 : vector<8x128xf32> to vector<1x8x128xf32>
      tpu.vector_store %arg6[%c1_35, %c0_36, %c0_37], %64 {strides = array<i32>} : memref<3x8x128xf32, #tpu.memory_space<vmem>>, vector<1x8x128xf32>,
    } else {
    }
    %c0 = arith.constant 0 : index
    %c0_3 = arith.constant 0 : index
    %6 = vector.load %arg3[%c0, %c0_3] : memref<64x128xf32, #tpu.memory_space<vmem>>, vector<64x128xf32>
    %7 = math.absf %6 : vector<64x128xf32>
    %cst = arith.constant 5.000000e+00 : f32
    %8 = vector.broadcast %cst : f32 to vector<64x128xf32>
    %9 = arith.subf %7, %8 : vector<64x128xf32>
    %cst_4 = arith.constant 0.000000e+00 : f32
    %10 = vector.broadcast %cst_4 : f32 to vector<64x128xf32>
    %11 = arith.maximumf %9, %10 : vector<64x128xf32>
    %c0_5 = arith.constant 0 : index
    %c0_6 = arith.constant 0 : index
    %12 = vector.load %arg4[%c0_5, %c0_6] : memref<64x1xf32, #tpu.memory_space<vmem>>, vector<64x1xf32>
    %cst_7 = arith.constant 5.000000e-01 : f32
    %13 = vector.broadcast %cst_7 : f32 to vector<64x1xf32>
    %14 = arith.cmpf ogt, %12, %13 : vector<64x1xf32>
    %cst_8 = arith.constant 0.000000e+00 : f32
    %15 = vector.shape_cast %14 : vector<64x1xi1> to vector<64x1xi1>
    %16 = vector.broadcast %15 : vector<64x1xi1> to vector<64x128xi1>
    %17 = vector.broadcast %cst_8 : f32 to vector<64x128xf32>
    %18 = arith.select %16, %11, %17 : vector<64x128xi1>, vector<64x128xf32>
    %c2 = arith.constant 2 : index
    %c0_9 = arith.constant 0 : index
    %c0_10 = arith.constant 0 : index
    %19 = vector.load %arg6[%c2, %c0_9, %c0_10] : memref<3x8x128xf32, #tpu.memory_space<vmem>>, vector<1x8x128xf32>
    %20 = vector.shape_cast %19 : vector<1x8x128xf32> to vector<8x128xf32>
    %21 = vector.shape_cast %18 : vector<64x128xf32> to vector<8x8x128xf32>
    %cst_11 = arith.constant dense<0.000000e+00> : vector<8x128xf32>
    %22 = vector.multi_reduction <add>, %21, %cst_11 [0] : vector<8x8x128xf32> to vector<8x128xf32>
    %23 = arith.addf %20, %22 : vector<8x128xf32>
    %c2_12 = arith.constant 2 : index
    %c0_13 = arith.constant 0 : index
    %c0_14 = arith.constant 0 : index
    %24 = vector.load %arg6[%c2_12, %c0_13, %c0_14] : memref<3x8x128xf32, #tpu.memory_space<vmem>>, vector<1x8x128xf32>
    %25 = vector.shape_cast %24 : vector<1x8x128xf32> to vector<8x128xf32>
    %26 = vector.shape_cast %23 : vector<8x128xf32> to vector<1x8x128xf32>
    tpu.vector_store %arg6[%c2_12, %c0_13, %c0_14], %26 {strides = array<i32>} : memref<3x8x128xf32, #tpu.memory_space<vmem>>, vector<1x8x128xf32>,
    %c0_i32_15 = arith.constant 0 : i32
    %27 = arith.cmpi eq, %arg0, %c0_i32_15 : i32
    %28 = arith.extui %27 : i1 to i32
    %c0_i32_16 = arith.constant 0 : i32
    %29 = arith.cmpi ne, %28, %c0_i32_16 : i32
    scf.if %29 {
      %c0_17 = arith.constant 0 : index
      %c0_18 = arith.constant 0 : index
      %c0_19 = arith.constant 0 : index
      %30 = vector.load %arg6[%c0_17, %c0_18, %c0_19] : memref<3x8x128xf32, #tpu.memory_space<vmem>>, vector<3x8x128xf32>
      %c0_20 = arith.constant 0 : index
      %c0_21 = arith.constant 0 : index
      %c0_22 = arith.constant 0 : index
      %31 = vector.load %arg5[%c0_20, %c0_21, %c0_22] : memref<3x8x128xf32, #tpu.memory_space<vmem>>, vector<3x8x128xf32>
      tpu.vector_store %arg5[%c0_20, %c0_21, %c0_22], %30 {strides = array<i32>} : memref<3x8x128xf32, #tpu.memory_space<vmem>>, vector<3x8x128xf32>,
    } else {
    }
    return
  }
  func.func @transform_0(%arg0: i32) -> (i32, i32) {
    %c0_i32 = arith.constant 0 : i32
    %0 = arith.minsi %arg0, %c0_i32 : i32
    %c0_i32_0 = arith.constant 0 : i32
    %c0_i32_1 = arith.constant 0 : i32
    return %0, %c0_i32_0 : i32, i32
  }
  func.func @transform_1(%arg0: i32) -> (i32, i32) {
    %c0_i32 = arith.constant 0 : i32
    %0 = arith.minsi %arg0, %c0_i32 : i32
    %c0_i32_0 = arith.constant 0 : i32
    %c0_i32_1 = arith.constant 0 : i32
    return %0, %c0_i32_0 : i32, i32
  }
  func.func @transform_2(%arg0: i32) -> (i32, i32) {
    %c0_i32 = arith.constant 0 : i32
    %0 = arith.minsi %arg0, %c0_i32 : i32
    %c0_i32_0 = arith.constant 0 : i32
    %c0_i32_1 = arith.constant 0 : i32
    return %0, %c0_i32_0 : i32, i32
  }
  func.func @transform_3(%arg0: i32) -> (i32, i32) {
    %c0_i32 = arith.constant 0 : i32
    %c0_i32_0 = arith.constant 0 : i32
    %c0_i32_1 = arith.constant 0 : i32
    return %c0_i32, %c0_i32_0 : i32, i32
  }
  func.func @transform_4(%arg0: i32) -> (i32, i32, i32) {
    %c0_i32 = arith.constant 0 : i32
    %c0_i32_0 = arith.constant 0 : i32
    %c0_i32_1 = arith.constant 0 : i32
    %c0_i32_2 = arith.constant 0 : i32
    return %c0_i32, %c0_i32_0, %c0_i32_1 : i32, i32, i32
  }
}

</mosaic_0001>

<llo_original>
// kernel: tpu_custom_call.1
$region0: #{tpu_custom_call.1}
  #allocation0 [shape = 'u32[]', space=smem, size = 0x4, offset = 0x4, fixed_abs, tag = 'smem constant byte address 0x4 - core index']
  #allocation1 [shape = 'u32[144,128]{1,0:T(1,128)}', space=vmem, size = 0x12000, scoped, tag = 'internal scratch']
  #allocation2 [shape = 'f32[3,8,128]{2,1,0:T(8,128)}', space=vmem, size = 0x3000, scoped, tag = 'scratch operand']
  %s0 = inlined_call_operand.hbm [shape: f32[12,128], index: 0, kind: input, shape index: {}]
  %s1 = inlined_call_operand.hbm [shape: f32[12,128], index: 1, kind: input, shape index: {}]
  %s2 = inlined_call_operand.vmem [shape: f32[64,128], index: 2, kind: input, shape index: {}]
  %s3 = inlined_call_operand.vmem [shape: f32[64,1], index: 3, kind: input, shape index: {}]
  %s4 = inlined_call_operand.hbm [shape: f32[3,8,128], index: 4, kind: output, shape index: {}]
  %s5 = sld [smem:[#allocation0]]
  $region42: #{tpu_custom_call.1} parent=0
    _
  %s7 = ssub.s32 1, %s5
  %s8 = scalar_select 0, %s7, %s5
  $region1: #{tpu_custom_call.1} parent=0
    #allocation3 [shape = 'u8[8192]{0}', space=vmem, size = 0x2000, scoped, tag = 'input window, operand 0, single buffered']
    #allocation4 [shape = 's32[1]{0}', space=sflag, size = 0x4, scoped, tag = 'scoped memory for tpu_custom_call.1']
    #allocation5 [shape = 's32[1]{0}', space=sflag, size = 0x4, scoped, tag = 'scoped memory for tpu_custom_call.1']
    #allocation6 [shape = 'u8[8192]{0}', space=vmem, size = 0x2000, scoped, tag = 'input window, operand 1, single buffered']
    #allocation7 [shape = 's32[1]{0}', space=sflag, size = 0x4, scoped, tag = 'scoped memory for tpu_custom_call.1']
    #allocation8 [shape = 'u8[12288]{0}', space=vmem, size = 0x3000, scoped, tag = 'output window, operand 0, single buffered']
    %9 = vsyncpa [#allocation4], 0
    %10 = vsyncpa [#allocation7], 0
    %11 = vsyncpa [#allocation5], 0
    // Predicated region
    $region2: #{tpu_custom_call.1} parent=1 // pred_check
      _
    $region3: #{tpu_custom_call.1} parent=1 // pred_check_branch
      %13 = sbr.rel (0) target = $region5
    $region4: #{tpu_custom_call.1} parent=1 // pred_region
      %s15 = ssub.s32 256, 256
      %16 = vsyncadd [#allocation4], %s15
      %s17 = sshll.u32 [#allocation3], 4
      %s18 = int_to_ptr.vmem [resolvable:$true] %s17
      %23 = dma.hbm_to_vmem [thread:$0]  %s0, 256, %s18, [#allocation4], 128, 128, 8
    $region5: #{tpu_custom_call.1} parent=1 // pred_fallthru
      _
    // Predicated region
    $region6: #{tpu_custom_call.1} parent=1 // pred_check
      _
    $region7: #{tpu_custom_call.1} parent=1 // pred_check_branch
      %25 = sbr.rel (0) target = $region9
    $region8: #{tpu_custom_call.1} parent=1 // pred_region
      %s27 = ssub.s32 256, 256
      %28 = vsyncadd [#allocation7], %s27
      %s29 = sshll.u32 [#allocation6], 4
      %s30 = int_to_ptr.vmem [resolvable:$true] %s29
      %35 = dma.hbm_to_vmem [thread:$0]  %s1, 256, %s30, [#allocation7], 128, 128, 8
    $region9: #{tpu_custom_call.1} parent=1 // pred_fallthru
      _
    // Predicated region
    $region10: #{tpu_custom_call.1} parent=1 // pred_check
      _
    $region11: #{tpu_custom_call.1} parent=1 // pred_check_branch
      %37 = sbr.rel (0) target = $region13
    $region12: #{tpu_custom_call.1} parent=1 // pred_region
      _
    $region13: #{tpu_custom_call.1} parent=1 // pred_fallthru
      _
    // Predicated region
    $region14: #{tpu_custom_call.1} parent=1 // pred_check
      _
    $region15: #{tpu_custom_call.1} parent=1 // pred_check_branch
      %39 = sbr.rel (0) target = $region17
    $region16: #{tpu_custom_call.1} parent=1 // pred_region
      _
    $region17: #{tpu_custom_call.1} parent=1 // pred_fallthru
      _
    // Predicated region
    $region18: #{tpu_custom_call.1} parent=1 // pred_check
      _
    $region19: #{tpu_custom_call.1} parent=1 // pred_check_branch
      %41 = sbr.rel (0) target = $region21
    $region20: #{tpu_custom_call.1} parent=1 // pred_region
      %42 = dma.done [#allocation4], 256
    $region21: #{tpu_custom_call.1} parent=1 // pred_fallthru
      _
    // Predicated region
    $region22: #{tpu_custom_call.1} parent=1 // pred_check
      _
    $region23: #{tpu_custom_call.1} parent=1 // pred_check_branch
      %44 = sbr.rel (0) target = $region25
    $region24: #{tpu_custom_call.1} parent=1 // pred_region
      %45 = dma.done [#allocation7], 256
    $region25: #{tpu_custom_call.1} parent=1 // pred_fallthru
      _
    %p46 = scmp.eq.s32.totalorder 0, 0
    // Predicated region
    $region26: #{tpu_custom_call.1} parent=1 // pred_check
      %p47 = pneg %p46
    $region27: #{tpu_custom_call.1} parent=1 // pred_check_branch
      %49 = sbr.rel (%p47) target = $region29
    $region28: #{tpu_custom_call.1} parent=1 // pred_region
      %50 = vst [vmem:[#allocation2] sm:$0xff] 0.0
      %51 = vst [vmem:[#allocation2 + $0x8] sm:$0xff] 0.0
      %52 = vst [vmem:[#allocation2 + $0x10] sm:$0xff] 0.0
      %v53 = vld [vmem:[#allocation3] sm:$0xff]
      %v54 = vld [vmem:[#allocation3 + $0x8] sm:$0xff]
      %s55 = smul.u32 0, 16
      %v56 = vlaneseq
      %v57 = vshrl.u32 %v56, 7
      %v58 = vadd.s32 %v57, 8
      %v59 = vstv %s55
      %v60 = vadd.s32 %v59, %v57
      %v61 = vadd.s32 %v59, %v58
      %vm62 = vcmp.lt.s32.totalorder %v60, 12
      %vm63 = vcmp.lt.s32.totalorder %v61, 12
      %v64 = vld [vmem:[#allocation6] sm:$0xff]
      %v65 = vld [vmem:[#allocation6 + $0x8] sm:$0xff]
      %v66 = vsub.f32 %v53, %v64
      %v67 = vsub.f32 %v54, %v65
      %v68 = vand.u32 2147483647, %v66
      %v69 = vand.u32 2147483647, %v67
      %v70 = vsel %vm62, %v68, 0.0
      %v71 = vsel %vm63, %v69, 0.0
      %v72 = vld [vmem:[#allocation2] sm:$0xff]
      %v73 = vadd.f32 %v70, %v71
      %v74 = vadd.f32 %v72, %v73
      %75 = vst [vmem:[#allocation2] sm:$0xff] %v74
      %v76 = vand.u32 2147483647, %v53
      %v77 = vand.u32 2147483647, %v54
      %v78 = vsub.f32 %v76, 10.0
      %v79 = vsub.f32 %v77, 10.0
      %v80 = vmax.f32 %v78, 0.0
      %v81 = vmax.f32 %v79, 0.0
      %v82 = vsel %vm62, %v80, 0.0
      %v83 = vsel %vm63, %v81, 0.0
      %s84 = scalar_lea.vmem [#allocation2], 8
      %v85 = vld [vmem:[%s84] sm:$0xff]
      %v86 = vadd.f32 %v82, %v83
      %v87 = vadd.f32 %v85, %v86
      %88 = vst [vmem:[%s84] sm:$0xff] %v87
    $region29: #{tpu_custom_call.1} parent=1 // pred_fallthru
      _
    %v89 = vld [vmem:[%s2] sm:$0xff]
    %v90 = vld [vmem:[%s2 + $0x8] sm:$0xff]
    %v91 = vld [vmem:[%s2 + $0x10] sm:$0xff]
    %v92 = vld [vmem:[%s2 + $0x18] sm:$0xff]
    %v93 = vld [vmem:[%s2 + $0x20] sm:$0xff]
    %v94 = vld [vmem:[%s2 + $0x28] sm:$0xff]
    %v95 = vld [vmem:[%s2 + $0x30] sm:$0xff]
    %v96 = vld [vmem:[%s2 + $0x38] sm:$0xff]
    %v97 = vand.u32 2147483647, %v89
    %v98 = vand.u32 2147483647, %v90
    %v99 = vand.u32 2147483647, %v91
    %v100 = vand.u32 2147483647, %v92
    %v101 = vand.u32 2147483647, %v93
    %v102 = vand.u32 2147483647, %v94
    %v103 = vand.u32 2147483647, %v95
    %v104 = vand.u32 2147483647, %v96
    %v105 = vsub.f32 %v97, 5.0
    %v106 = vsub.f32 %v98, 5.0
    %v107 = vsub.f32 %v99, 5.0
    %v108 = vsub.f32 %v100, 5.0
    %v109 = vsub.f32 %v101, 5.0
    %v110 = vsub.f32 %v102, 5.0
    %v111 = vsub.f32 %v103, 5.0
    %v112 = vsub.f32 %v104, 5.0
    %v113 = vmax.f32 %v105, 0.0
    %v114 = vmax.f32 %v106, 0.0
    %v115 = vmax.f32 %v107, 0.0
    %v116 = vmax.f32 %v108, 0.0
    %v117 = vmax.f32 %v109, 0.0
    %v118 = vmax.f32 %v110, 0.0
    %v119 = vmax.f32 %v111, 0.0
    %v120 = vmax.f32 %v112, 0.0
    %v121 = vld [vmem:[%s3] sm:$0xff]
    %v122 = vld [vmem:[%s3 + $0x8] sm:$0xff]
    %v123 = vld [vmem:[%s3 + $0x10] sm:$0xff]
    %v124 = vld [vmem:[%s3 + $0x18] sm:$0xff]
    %v125 = vld [vmem:[%s3 + $0x20] sm:$0xff]
    %v126 = vld [vmem:[%s3 + $0x28] sm:$0xff]
    %v127 = vld [vmem:[%s3 + $0x30] sm:$0xff]
    %v128 = vld [vmem:[%s3 + $0x38] sm:$0xff]
    %vm129 = vcmp.gt.f32.partialorder %v121, 0.5
    %vm130 = vcmp.gt.f32.partialorder %v122, 0.5
    %vm131 = vcmp.gt.f32.partialorder %v123, 0.5
    %vm132 = vcmp.gt.f32.partialorder %v124, 0.5
    %vm133 = vcmp.gt.f32.partialorder %v125, 0.5
    %vm134 = vcmp.gt.f32.partialorder %v126, 0.5
    %vm135 = vcmp.gt.f32.partialorder %v127, 0.5
    %vm136 = vcmp.gt.f32.partialorder %v128, 0.5
    %v137 = vsel %vm129, 1, 0
    %v138 = vsel %vm130, 1, 0
    %v139 = vsel %vm131, 1, 0
    %v140 = vsel %vm132, 1, 0
    %v141 = vsel %vm133, 1, 0
    %v142 = vsel %vm134, 1, 0
    %v143 = vsel %vm135, 1, 0
    %v144 = vsel %vm136, 1, 0
    %145 = vset.pattern.permute.xlu0 0
    %146 = vperm.xlu0 %145, %v137
    %v147 = vpop.permute.xlu0 %146
    %148 = vset.pattern.permute.xlu0 0
    %149 = vperm.xlu0 %148, %v138
    %v150 = vpop.permute.xlu0 %149
    %151 = vset.pattern.permute.xlu0 0
    %152 = vperm.xlu0 %151, %v139
    %v153 = vpop.permute.xlu0 %152
    %154 = vset.pattern.permute.xlu0 0
    %155 = vperm.xlu0 %154, %v140
    %v156 = vpop.permute.xlu0 %155
    %157 = vset.pattern.permute.xlu0 0
    %158 = vperm.xlu0 %157, %v141
    %v159 = vpop.permute.xlu0 %158
    %160 = vset.pattern.permute.xlu0 0
    %161 = vperm.xlu0 %160, %v142
    %v162 = vpop.permute.xlu0 %161
    %163 = vset.pattern.permute.xlu0 0
    %164 = vperm.xlu0 %163, %v143
    %v165 = vpop.permute.xlu0 %164
    %166 = vset.pattern.permute.xlu0 0
    %167 = vperm.xlu0 %166, %v144
    %v168 = vpop.permute.xlu0 %167
    %vm169 = vcmp.eq.s32.totalorder %v147, 1
    %vm170 = vcmp.eq.s32.totalorder %v150, 1
    %vm171 = vcmp.eq.s32.totalorder %v153, 1
    %vm172 = vcmp.eq.s32.totalorder %v156, 1
    %vm173 = vcmp.eq.s32.totalorder %v159, 1
    %vm174 = vcmp.eq.s32.totalorder %v162, 1
    %vm175 = vcmp.eq.s32.totalorder %v165, 1
    %vm176 = vcmp.eq.s32.totalorder %v168, 1
    %v177 = vsel %vm169, %v113, 0.0
    %v178 = vsel %vm170, %v114, 0.0
    %v179 = vsel %vm171, %v115, 0.0
    %v180 = vsel %vm172, %v116, 0.0
    %v181 = vsel %vm173, %v117, 0.0
    %v182 = vsel %vm174, %v118, 0.0
    %v183 = vsel %vm175, %v119, 0.0
    %v184 = vsel %vm176, %v120, 0.0
    %s185 = scalar_lea.vmem [#allocation2], 16
    %v186 = vld [vmem:[%s185] sm:$0xff]
    %v187 = vadd.f32 %v177, %v178
    %v188 = vadd.f32 %v187, %v179
    %v189 = vadd.f32 %v188, %v180
    %v190 = vadd.f32 %v189, %v181
    %v191 = vadd.f32 %v190, %v182
    %v192 = vadd.f32 %v191, %v183
    %v193 = vadd.f32 %v192, %v184
    %v194 = vadd.f32 %v186, %v193
    %195 = vst [vmem:[%s185] sm:$0xff] %v194
    // Predicated region
    $region30: #{tpu_custom_call.1} parent=1 // pred_check
      %p196 = pneg %p46
    $region31: #{tpu_custom_call.1} parent=1 // pred_check_branch
      %198 = sbr.rel (%p196) target = $region33
    $region32: #{tpu_custom_call.1} parent=1 // pred_region
      %v199 = vld [vmem:[#allocation2] sm:$0xff]
      %v200 = vld [vmem:[#allocation2 + $0x8] sm:$0xff]
      %v201 = vld [vmem:[#allocation2 + $0x10] sm:$0xff]
      %202 = vst [vmem:[#allocation8] sm:$0xff] %v199
      %203 = vst [vmem:[#allocation8 + $0x8] sm:$0xff] %v200
      %204 = vst [vmem:[#allocation8 + $0x10] sm:$0xff] %v201
    $region33: #{tpu_custom_call.1} parent=1 // pred_fallthru
      _
    // Predicated region
    $region34: #{tpu_custom_call.1} parent=1 // pred_check
      _
    $region35: #{tpu_custom_call.1} parent=1 // pred_check_branch
      %206 = sbr.rel (0) target = $region37
    $region36: #{tpu_custom_call.1} parent=1 // pred_region
      %s208 = ssub.s32 384, 384
      %209 = vsyncadd [#allocation5], %s208
      %s210 = sshll.u32 [#allocation8], 4
      %s211 = int_to_ptr.vmem [resolvable:$true] %s210
      %216 = dma.vmem_to_hbm [thread:$0]  %s211, 384, %s4, [#allocation5], 128, 128, 8
    $region37: #{tpu_custom_call.1} parent=1 // pred_fallthru
      _
    // Predicated region
    $region38: #{tpu_custom_call.1} parent=1 // pred_check
      _
    $region39: #{tpu_custom_call.1} parent=1 // pred_check_branch
      %218 = sbr.rel (0) target = $region41
    $region40: #{tpu_custom_call.1} parent=1 // pred_region
      %219 = dma.done [#allocation5], 384
    $region41: #{tpu_custom_call.1} parent=1 // pred_fallthru
      _
    %220 = vsyncpa [#allocation4], 1
    %221 = vsyncpa [#allocation7], 1
    %222 = vsyncpa [#allocation5], 1

</llo_original>
